<compile_context>
chip_gen: v7x
topology: tpu7x:2x2x1
jax: 0.10.0
libtpu: 0.0.40
codegen_flags: <defaults>
</compile_context>

<pallas_src>
import jax
import jax.numpy as jnp
from jax.experimental import pallas as pl
from jax.experimental.pallas import tpu as pltpu


VOCAB = 1000
EMB_DIM = 16
LANES = 128


def _embedding_kernel(idx_ref, tables_ref, out_ref):
    # idx_ref:    SMEM (B*S*C,) int32 -- scalar-prefetched, flattened [b, s, c],
    #                                    already clamped to [0, V-1] by the wrapper.
    # tables_ref: VMEM (C, V, D) f32  -- stacked per-feature embedding tables.
    # out_ref:    VMEM (R, 128) f32   -- lane-dense view of [B*S, C*D],
    #                                    R = B*S*C*D / 128.
    C, V, D = tables_ref.shape
    n_rows, lanes = out_ref.shape
    chunks_per_row = lanes // D          # 8 embedding rows per 128-lane output row

    rows = []
    for r in range(n_rows):              # static unroll: n_rows = 8
        chunks = []
        for k in range(chunks_per_row):  # static unroll: 8 chunks of D = 16 lanes
            g = r * chunks_per_row + k   # global chunk index == flat (b, s, c) index
            c = g % C                    # feature / table id (static)
            idx = idx_ref[g]             # scalar SMEM read: vocab row for this chunk
            chunks.append(tables_ref[c, pl.ds(idx, 1), :])   # (1, D) row gather
        rows.append(jnp.concatenate(chunks, axis=-1))        # (1, 128) lane-dense row
    # Single full-lane, unmasked store of exactly one (8, 128) vreg.
    out_ref[...] = jnp.concatenate(rows, axis=0)


def embedding_layer_forward(cat_inputs, tables):
    """cat_inputs: int [B, S, C]; tables: float32 [C, V, D].
    Returns float32 [B, S, C*D] (== torch.cat of per-feature embeddings)."""
    B, S, C = cat_inputs.shape
    Ct, V, D = tables.shape
    assert Ct == C
    # Lane-dense packing requires D | 128 and 128 | B*S*C*D (true for D=16, B*S*C=64).
    assert LANES % D == 0 and (B * S * C * D) % LANES == 0, (B, S, C, D)
    n_phys_rows = (B * S * C * D) // LANES

    # Flatten + clamp OOB indices in one fused XLA op outside the kernel
    # (PyTorch nn.Embedding would raise; an unchecked dynamic slice would be a
    # silent OOB VMEM read).  Element (b, s, c) sits at flat index
    # (b*S + s)*C + c -- exactly the chunk order the kernel consumes, so no
    # transpose is ever materialized.
    idx_flat = jnp.clip(cat_inputs.astype(jnp.int32), 0, V - 1).reshape(B * S * C)

    out = pl.pallas_call(
        _embedding_kernel,
        out_shape=jax.ShapeDtypeStruct((n_phys_rows, LANES), jnp.float32),
        grid_spec=pltpu.PrefetchScalarGridSpec(
            num_scalar_prefetch=1,
            grid=(1,),
            in_specs=[
                # Whole stacked table VMEM-resident (~2 MiB/buffer after lane
                # padding of D=16 -> 128; HBM traffic is the unpadded 256 KiB).
                # TODO(synk): for realistic vocab sizes keep the tables in HBM
                # (memory_space=pl.ANY) and gather only the B*S*C needed rows
                # with make_async_copy driven by the prefetched indices.
                pl.BlockSpec((C, V, D), lambda i, idx: (0, 0, 0)),
            ],
            out_specs=pl.BlockSpec((n_phys_rows, LANES), lambda i, idx: (0, 0)),
        ),
        compiler_params=pltpu.CompilerParams(
            dimension_semantics=("arbitrary",)),
    )(idx_flat, tables)

    # Row-major flat order of (R, 128) equals that of (B*S, C*D): pure reshape.
    return out.reshape(B, S, C * D)


def _reference(cat_inputs, tables):
    # Pure-JAX reference: emb_i(cat_inputs[:, :, i]) concatenated along -1.
    vecs = [tables[i][cat_inputs[:, :, i]] for i in range(tables.shape[0])]
    return jnp.concatenate(vecs, axis=-1)


if __name__ == "__main__":
    key = jax.random.PRNGKey(0)
    B, S, C = 2, 8, 4  # batch, seq, cat_input_size

    k_idx, k_tab = jax.random.split(key)
    cat_inputs = jax.random.randint(k_idx, (B, S, C), 0, VOCAB, dtype=jnp.int32)
    # Deterministic parameter init (nn.Embedding ~ N(0,1) by default).
    tables = jax.random.normal(k_tab, (C, VOCAB, EMB_DIM), dtype=jnp.float32)

    out = embedding_layer_forward(cat_inputs, tables)
    jax.block_until_ready(out)

    ref = _reference(cat_inputs, tables)
    assert out.shape == (B, S, C * EMB_DIM), out.shape
    assert jnp.allclose(out, ref, atol=1e-5, rtol=1e-5), "mismatch vs reference"

    print("KERNEL_OK")
</pallas_src>

<mosaic_0001>
module attributes {stable_mosaic.version = 11 : i64} {
  func.func @_embedding_kernel(%arg0: i32, %arg1: memref<64xi32, #tpu.memory_space<smem>>, %arg2: memref<4x1000x16xf32, #tpu.memory_space<vmem>>, %arg3: memref<8x128xf32, #tpu.memory_space<vmem>>) attributes {dimension_semantics = [#tpu.dimension_semantics<arbitrary>], iteration_bounds = array<i64: 1>, scalar_prefetch = 1 : i64, scratch_operands = 0 : i64, tpu.core_type = #tpu.core_type<tc>, window_params = [{pipeline_mode = #tpu.pipeline_mode<synchronous>, transform_indices = @transform_0, window_bounds = array<i64: 4, 1000, 16>}, {pipeline_mode = #tpu.pipeline_mode<synchronous>, transform_indices = @transform_1, window_bounds = array<i64: 8, 128>}]} {
    %c0 = arith.constant 0 : index
    %0 = memref.load %arg1[%c0] : memref<64xi32, #tpu.memory_space<smem>>
    %c0_0 = arith.constant 0 : index
    %1 = arith.index_cast %0 : i32 to index
    %c0_1 = arith.constant 0 : index
    %2 = vector.load %arg2[%c0_0, %1, %c0_1] : memref<4x1000x16xf32, #tpu.memory_space<vmem>>, vector<1x1x16xf32>
    %3 = vector.shape_cast %2 : vector<1x1x16xf32> to vector<1x16xf32>
    %c1 = arith.constant 1 : index
    %4 = memref.load %arg1[%c1] : memref<64xi32, #tpu.memory_space<smem>>
    %c1_2 = arith.constant 1 : index
    %5 = arith.index_cast %4 : i32 to index
    %c0_3 = arith.constant 0 : index
    %6 = vector.load %arg2[%c1_2, %5, %c0_3] : memref<4x1000x16xf32, #tpu.memory_space<vmem>>, vector<1x1x16xf32>
    %7 = vector.shape_cast %6 : vector<1x1x16xf32> to vector<1x16xf32>
    %c2 = arith.constant 2 : index
    %8 = memref.load %arg1[%c2] : memref<64xi32, #tpu.memory_space<smem>>
    %c2_4 = arith.constant 2 : index
    %9 = arith.index_cast %8 : i32 to index
    %c0_5 = arith.constant 0 : index
    %10 = vector.load %arg2[%c2_4, %9, %c0_5] : memref<4x1000x16xf32, #tpu.memory_space<vmem>>, vector<1x1x16xf32>
    %11 = vector.shape_cast %10 : vector<1x1x16xf32> to vector<1x16xf32>
    %c3 = arith.constant 3 : index
    %12 = memref.load %arg1[%c3] : memref<64xi32, #tpu.memory_space<smem>>
    %c3_6 = arith.constant 3 : index
    %13 = arith.index_cast %12 : i32 to index
    %c0_7 = arith.constant 0 : index
    %14 = vector.load %arg2[%c3_6, %13, %c0_7] : memref<4x1000x16xf32, #tpu.memory_space<vmem>>, vector<1x1x16xf32>
    %15 = vector.shape_cast %14 : vector<1x1x16xf32> to vector<1x16xf32>
    %c4 = arith.constant 4 : index
    %16 = memref.load %arg1[%c4] : memref<64xi32, #tpu.memory_space<smem>>
    %c0_8 = arith.constant 0 : index
    %17 = arith.index_cast %16 : i32 to index
    %c0_9 = arith.constant 0 : index
    %18 = vector.load %arg2[%c0_8, %17, %c0_9] : memref<4x1000x16xf32, #tpu.memory_space<vmem>>, vector<1x1x16xf32>
    %19 = vector.shape_cast %18 : vector<1x1x16xf32> to vector<1x16xf32>
    %c5 = arith.constant 5 : index
    %20 = memref.load %arg1[%c5] : memref<64xi32, #tpu.memory_space<smem>>
    %c1_10 = arith.constant 1 : index
    %21 = arith.index_cast %20 : i32 to index
    %c0_11 = arith.constant 0 : index
    %22 = vector.load %arg2[%c1_10, %21, %c0_11] : memref<4x1000x16xf32, #tpu.memory_space<vmem>>, vector<1x1x16xf32>
    %23 = vector.shape_cast %22 : vector<1x1x16xf32> to vector<1x16xf32>
    %c6 = arith.constant 6 : index
    %24 = memref.load %arg1[%c6] : memref<64xi32, #tpu.memory_space<smem>>
    %c2_12 = arith.constant 2 : index
    %25 = arith.index_cast %24 : i32 to index
    %c0_13 = arith.constant 0 : index
    %26 = vector.load %arg2[%c2_12, %25, %c0_13] : memref<4x1000x16xf32, #tpu.memory_space<vmem>>, vector<1x1x16xf32>
    %27 = vector.shape_cast %26 : vector<1x1x16xf32> to vector<1x16xf32>
    %c7 = arith.constant 7 : index
    %28 = memref.load %arg1[%c7] : memref<64xi32, #tpu.memory_space<smem>>
    %c3_14 = arith.constant 3 : index
    %29 = arith.index_cast %28 : i32 to index
    %c0_15 = arith.constant 0 : index
    %30 = vector.load %arg2[%c3_14, %29, %c0_15] : memref<4x1000x16xf32, #tpu.memory_space<vmem>>, vector<1x1x16xf32>
    %31 = vector.shape_cast %30 : vector<1x1x16xf32> to vector<1x16xf32>
    %32 = tpu.concatenate %3, %7, %11, %15, %19, %23, %27, %31 in 1 : vector<1x16xf32>, vector<1x16xf32>, vector<1x16xf32>, vector<1x16xf32>, vector<1x16xf32>, vector<1x16xf32>, vector<1x16xf32>, vector<1x16xf32> -> vector<1x128xf32>
    %c8 = arith.constant 8 : index
    %33 = memref.load %arg1[%c8] : memref<64xi32, #tpu.memory_space<smem>>
    %c0_16 = arith.constant 0 : index
    %34 = arith.index_cast %33 : i32 to index
    %c0_17 = arith.constant 0 : index
    %35 = vector.load %arg2[%c0_16, %34, %c0_17] : memref<4x1000x16xf32, #tpu.memory_space<vmem>>, vector<1x1x16xf32>
    %36 = vector.shape_cast %35 : vector<1x1x16xf32> to vector<1x16xf32>
    %c9 = arith.constant 9 : index
    %37 = memref.load %arg1[%c9] : memref<64xi32, #tpu.memory_space<smem>>
    %c1_18 = arith.constant 1 : index
    %38 = arith.index_cast %37 : i32 to index
    %c0_19 = arith.constant 0 : index
    %39 = vector.load %arg2[%c1_18, %38, %c0_19] : memref<4x1000x16xf32, #tpu.memory_space<vmem>>, vector<1x1x16xf32>
    %40 = vector.shape_cast %39 : vector<1x1x16xf32> to vector<1x16xf32>
    %c10 = arith.constant 10 : index
    %41 = memref.load %arg1[%c10] : memref<64xi32, #tpu.memory_space<smem>>
    %c2_20 = arith.constant 2 : index
    %42 = arith.index_cast %41 : i32 to index
    %c0_21 = arith.constant 0 : index
    %43 = vector.load %arg2[%c2_20, %42, %c0_21] : memref<4x1000x16xf32, #tpu.memory_space<vmem>>, vector<1x1x16xf32>
    %44 = vector.shape_cast %43 : vector<1x1x16xf32> to vector<1x16xf32>
    %c11 = arith.constant 11 : index
    %45 = memref.load %arg1[%c11] : memref<64xi32, #tpu.memory_space<smem>>
    %c3_22 = arith.constant 3 : index
    %46 = arith.index_cast %45 : i32 to index
    %c0_23 = arith.constant 0 : index
    %47 = vector.load %arg2[%c3_22, %46, %c0_23] : memref<4x1000x16xf32, #tpu.memory_space<vmem>>, vector<1x1x16xf32>
    %48 = vector.shape_cast %47 : vector<1x1x16xf32> to vector<1x16xf32>
    %c12 = arith.constant 12 : index
    %49 = memref.load %arg1[%c12] : memref<64xi32, #tpu.memory_space<smem>>
    %c0_24 = arith.constant 0 : index
    %50 = arith.index_cast %49 : i32 to index
    %c0_25 = arith.constant 0 : index
    %51 = vector.load %arg2[%c0_24, %50, %c0_25] : memref<4x1000x16xf32, #tpu.memory_space<vmem>>, vector<1x1x16xf32>
    %52 = vector.shape_cast %51 : vector<1x1x16xf32> to vector<1x16xf32>
    %c13 = arith.constant 13 : index
    %53 = memref.load %arg1[%c13] : memref<64xi32, #tpu.memory_space<smem>>
    %c1_26 = arith.constant 1 : index
    %54 = arith.index_cast %53 : i32 to index
    %c0_27 = arith.constant 0 : index
    %55 = vector.load %arg2[%c1_26, %54, %c0_27] : memref<4x1000x16xf32, #tpu.memory_space<vmem>>, vector<1x1x16xf32>
    %56 = vector.shape_cast %55 : vector<1x1x16xf32> to vector<1x16xf32>
    %c14 = arith.constant 14 : index
    %57 = memref.load %arg1[%c14] : memref<64xi32, #tpu.memory_space<smem>>
    %c2_28 = arith.constant 2 : index
    %58 = arith.index_cast %57 : i32 to index
    %c0_29 = arith.constant 0 : index
    %59 = vector.load %arg2[%c2_28, %58, %c0_29] : memref<4x1000x16xf32, #tpu.memory_space<vmem>>, vector<1x1x16xf32>
    %60 = vector.shape_cast %59 : vector<1x1x16xf32> to vector<1x16xf32>
    %c15 = arith.constant 15 : index
    %61 = memref.load %arg1[%c15] : memref<64xi32, #tpu.memory_space<smem>>
    %c3_30 = arith.constant 3 : index
    %62 = arith.index_cast %61 : i32 to index
    %c0_31 = arith.constant 0 : index
    %63 = vector.load %arg2[%c3_30, %62, %c0_31] : memref<4x1000x16xf32, #tpu.memory_space<vmem>>, vector<1x1x16xf32>
    %64 = vector.shape_cast %63 : vector<1x1x16xf32> to vector<1x16xf32>
    %65 = tpu.concatenate %36, %40, %44, %48, %52, %56, %60, %64 in 1 : vector<1x16xf32>, vector<1x16xf32>, vector<1x16xf32>, vector<1x16xf32>, vector<1x16xf32>, vector<1x16xf32>, vector<1x16xf32>, vector<1x16xf32> -> vector<1x128xf32>
    %c16 = arith.constant 16 : index
    %66 = memref.load %arg1[%c16] : memref<64xi32, #tpu.memory_space<smem>>
    %c0_32 = arith.constant 0 : index
    %67 = arith.index_cast %66 : i32 to index
    %c0_33 = arith.constant 0 : index
    %68 = vector.load %arg2[%c0_32, %67, %c0_33] : memref<4x1000x16xf32, #tpu.memory_space<vmem>>, vector<1x1x16xf32>
    %69 = vector.shape_cast %68 : vector<1x1x16xf32> to vector<1x16xf32>
    %c17 = arith.constant 17 : index
    %70 = memref.load %arg1[%c17] : memref<64xi32, #tpu.memory_space<smem>>
    %c1_34 = arith.constant 1 : index
    %71 = arith.index_cast %70 : i32 to index
    %c0_35 = arith.constant 0 : index
    %72 = vector.load %arg2[%c1_34, %71, %c0_35] : memref<4x1000x16xf32, #tpu.memory_space<vmem>>, vector<1x1x16xf32>
    %73 = vector.shape_cast %72 : vector<1x1x16xf32> to vector<1x16xf32>
    %c18 = arith.constant 18 : index
    %74 = memref.load %arg1[%c18] : memref<64xi32, #tpu.memory_space<smem>>
    %c2_36 = arith.constant 2 : index
    %75 = arith.index_cast %74 : i32 to index
    %c0_37 = arith.constant 0 : index
    %76 = vector.load %arg2[%c2_36, %75, %c0_37] : memref<4x1000x16xf32, #tpu.memory_space<vmem>>, vector<1x1x16xf32>
    %77 = vector.shape_cast %76 : vector<1x1x16xf32> to vector<1x16xf32>
    %c19 = arith.constant 19 : index
    %78 = memref.load %arg1[%c19] : memref<64xi32, #tpu.memory_space<smem>>
    %c3_38 = arith.constant 3 : index
    %79 = arith.index_cast %78 : i32 to index
    %c0_39 = arith.constant 0 : index
    %80 = vector.load %arg2[%c3_38, %79, %c0_39] : memref<4x1000x16xf32, #tpu.memory_space<vmem>>, vector<1x1x16xf32>
    %81 = vector.shape_cast %80 : vector<1x1x16xf32> to vector<1x16xf32>
    %c20 = arith.constant 20 : index
    %82 = memref.load %arg1[%c20] : memref<64xi32, #tpu.memory_space<smem>>
    %c0_40 = arith.constant 0 : index
    %83 = arith.index_cast %82 : i32 to index
    %c0_41 = arith.constant 0 : index
    %84 = vector.load %arg2[%c0_40, %83, %c0_41] : memref<4x1000x16xf32, #tpu.memory_space<vmem>>, vector<1x1x16xf32>
    %85 = vector.shape_cast %84 : vector<1x1x16xf32> to vector<1x16xf32>
    %c21 = arith.constant 21 : index
    %86 = memref.load %arg1[%c21] : memref<64xi32, #tpu.memory_space<smem>>
    %c1_42 = arith.constant 1 : index
    %87 = arith.index_cast %86 : i32 to index
    %c0_43 = arith.constant 0 : index
    %88 = vector.load %arg2[%c1_42, %87, %c0_43] : memref<4x1000x16xf32, #tpu.memory_space<vmem>>, vector<1x1x16xf32>
    %89 = vector.shape_cast %88 : vector<1x1x16xf32> to vector<1x16xf32>
    %c22 = arith.constant 22 : index
    %90 = memref.load %arg1[%c22] : memref<64xi32, #tpu.memory_space<smem>>
    %c2_44 = arith.constant 2 : index
    %91 = arith.index_cast %90 : i32 to index
    %c0_45 = arith.constant 0 : index
    %92 = vector.load %arg2[%c2_44, %91, %c0_45] : memref<4x1000x16xf32, #tpu.memory_space<vmem>>, vector<1x1x16xf32>
    %93 = vector.shape_cast %92 : vector<1x1x16xf32> to vector<1x16xf32>
    %c23 = arith.constant 23 : index
    %94 = memref.load %arg1[%c23] : memref<64xi32, #tpu.memory_space<smem>>
    %c3_46 = arith.constant 3 : index
    %95 = arith.index_cast %94 : i32 to index
    %c0_47 = arith.constant 0 : index
    %96 = vector.load %arg2[%c3_46, %95, %c0_47] : memref<4x1000x16xf32, #tpu.memory_space<vmem>>, vector<1x1x16xf32>
    %97 = vector.shape_cast %96 : vector<1x1x16xf32> to vector<1x16xf32>
    %98 = tpu.concatenate %69, %73, %77, %81, %85, %89, %93, %97 in 1 : vector<1x16xf32>, vector<1x16xf32>, vector<1x16xf32>, vector<1x16xf32>, vector<1x16xf32>, vector<1x16xf32>, vector<1x16xf32>, vector<1x16xf32> -> vector<1x128xf32>
    %c24 = arith.constant 24 : index
    %99 = memref.load %arg1[%c24] : memref<64xi32, #tpu.memory_space<smem>>
    %c0_48 = arith.constant 0 : index
    %100 = arith.index_cast %99 : i32 to index
    %c0_49 = arith.constant 0 : index
    %101 = vector.load %arg2[%c0_48, %100, %c0_49] : memref<4x1000x16xf32, #tpu.memory_space<vmem>>, vector<1x1x16xf32>
    %102 = vector.shape_cast %101 : vector<1x1x16xf32> to vector<1x16xf32>
    %c25 = arith.constant 25 : index
    %103 = memref.load %arg1[%c25] : memref<64xi32, #tpu.memory_space<smem>>
    %c1_50 = arith.constant 1 : index
    %104 = arith.index_cast %103 : i32 to index
    %c0_51 = arith.constant 0 : index
    %105 = vector.load %arg2[%c1_50, %104, %c0_51] : memref<4x1000x16xf32, #tpu.memory_space<vmem>>, vector<1x1x16xf32>
    %106 = vector.shape_cast %105 : vector<1x1x16xf32> to vector<1x16xf32>
    %c26 = arith.constant 26 : index
    %107 = memref.load %arg1[%c26] : memref<64xi32, #tpu.memory_space<smem>>
    %c2_52 = arith.constant 2 : index
    %108 = arith.index_cast %107 : i32 to index
    %c0_53 = arith.constant 0 : index
    %109 = vector.load %arg2[%c2_52, %108, %c0_53] : memref<4x1000x16xf32, #tpu.memory_space<vmem>>, vector<1x1x16xf32>
    %110 = vector.shape_cast %109 : vector<1x1x16xf32> to vector<1x16xf32>
    %c27 = arith.constant 27 : index
    %111 = memref.load %arg1[%c27] : memref<64xi32, #tpu.memory_space<smem>>
    %c3_54 = arith.constant 3 : index
    %112 = arith.index_cast %111 : i32 to index
    %c0_55 = arith.constant 0 : index
    %113 = vector.load %arg2[%c3_54, %112, %c0_55] : memref<4x1000x16xf32, #tpu.memory_space<vmem>>, vector<1x1x16xf32>
    %114 = vector.shape_cast %113 : vector<1x1x16xf32> to vector<1x16xf32>
    %c28 = arith.constant 28 : index
    %115 = memref.load %arg1[%c28] : memref<64xi32, #tpu.memory_space<smem>>
    %c0_56 = arith.constant 0 : index
    %116 = arith.index_cast %115 : i32 to index
    %c0_57 = arith.constant 0 : index
    %117 = vector.load %arg2[%c0_56, %116, %c0_57] : memref<4x1000x16xf32, #tpu.memory_space<vmem>>, vector<1x1x16xf32>
    %118 = vector.shape_cast %117 : vector<1x1x16xf32> to vector<1x16xf32>
    %c29 = arith.constant 29 : index
    %119 = memref.load %arg1[%c29] : memref<64xi32, #tpu.memory_space<smem>>
    %c1_58 = arith.constant 1 : index
    %120 = arith.index_cast %119 : i32 to index
    %c0_59 = arith.constant 0 : index
    %121 = vector.load %arg2[%c1_58, %120, %c0_59] : memref<4x1000x16xf32, #tpu.memory_space<vmem>>, vector<1x1x16xf32>
    %122 = vector.shape_cast %121 : vector<1x1x16xf32> to vector<1x16xf32>
    %c30 = arith.constant 30 : index
    %123 = memref.load %arg1[%c30] : memref<64xi32, #tpu.memory_space<smem>>
    %c2_60 = arith.constant 2 : index
    %124 = arith.index_cast %123 : i32 to index
    %c0_61 = arith.constant 0 : index
    %125 = vector.load %arg2[%c2_60, %124, %c0_61] : memref<4x1000x16xf32, #tpu.memory_space<vmem>>, vector<1x1x16xf32>
    %126 = vector.shape_cast %125 : vector<1x1x16xf32> to vector<1x16xf32>
    %c31 = arith.constant 31 : index
    %127 = memref.load %arg1[%c31] : memref<64xi32, #tpu.memory_space<smem>>
    %c3_62 = arith.constant 3 : index
    %128 = arith.index_cast %127 : i32 to index
    %c0_63 = arith.constant 0 : index
    %129 = vector.load %arg2[%c3_62, %128, %c0_63] : memref<4x1000x16xf32, #tpu.memory_space<vmem>>, vector<1x1x16xf32>
    %130 = vector.shape_cast %129 : vector<1x1x16xf32> to vector<1x16xf32>
    %131 = tpu.concatenate %102, %106, %110, %114, %118, %122, %126, %130 in 1 : vector<1x16xf32>, vector<1x16xf32>, vector<1x16xf32>, vector<1x16xf32>, vector<1x16xf32>, vector<1x16xf32>, vector<1x16xf32>, vector<1x16xf32> -> vector<1x128xf32>
    %c32 = arith.constant 32 : index
    %132 = memref.load %arg1[%c32] : memref<64xi32, #tpu.memory_space<smem>>
    %c0_64 = arith.constant 0 : index
    %133 = arith.index_cast %132 : i32 to index
    %c0_65 = arith.constant 0 : index
    %134 = vector.load %arg2[%c0_64, %133, %c0_65] : memref<4x1000x16xf32, #tpu.memory_space<vmem>>, vector<1x1x16xf32>
    %135 = vector.shape_cast %134 : vector<1x1x16xf32> to vector<1x16xf32>
    %c33 = arith.constant 33 : index
    %136 = memref.load %arg1[%c33] : memref<64xi32, #tpu.memory_space<smem>>
    %c1_66 = arith.constant 1 : index
    %137 = arith.index_cast %136 : i32 to index
    %c0_67 = arith.constant 0 : index
    %138 = vector.load %arg2[%c1_66, %137, %c0_67] : memref<4x1000x16xf32, #tpu.memory_space<vmem>>, vector<1x1x16xf32>
    %139 = vector.shape_cast %138 : vector<1x1x16xf32> to vector<1x16xf32>
    %c34 = arith.constant 34 : index
    %140 = memref.load %arg1[%c34] : memref<64xi32, #tpu.memory_space<smem>>
    %c2_68 = arith.constant 2 : index
    %141 = arith.index_cast %140 : i32 to index
    %c0_69 = arith.constant 0 : index
    %142 = vector.load %arg2[%c2_68, %141, %c0_69] : memref<4x1000x16xf32, #tpu.memory_space<vmem>>, vector<1x1x16xf32>
    %143 = vector.shape_cast %142 : vector<1x1x16xf32> to vector<1x16xf32>
    %c35 = arith.constant 35 : index
    %144 = memref.load %arg1[%c35] : memref<64xi32, #tpu.memory_space<smem>>
    %c3_70 = arith.constant 3 : index
    %145 = arith.index_cast %144 : i32 to index
    %c0_71 = arith.constant 0 : index
    %146 = vector.load %arg2[%c3_70, %145, %c0_71] : memref<4x1000x16xf32, #tpu.memory_space<vmem>>, vector<1x1x16xf32>
    %147 = vector.shape_cast %146 : vector<1x1x16xf32> to vector<1x16xf32>
    %c36 = arith.constant 36 : index
    %148 = memref.load %arg1[%c36] : memref<64xi32, #tpu.memory_space<smem>>
    %c0_72 = arith.constant 0 : index
    %149 = arith.index_cast %148 : i32 to index
    %c0_73 = arith.constant 0 : index
    %150 = vector.load %arg2[%c0_72, %149, %c0_73] : memref<4x1000x16xf32, #tpu.memory_space<vmem>>, vector<1x1x16xf32>
    %151 = vector.shape_cast %150 : vector<1x1x16xf32> to vector<1x16xf32>
    %c37 = arith.constant 37 : index
    %152 = memref.load %arg1[%c37] : memref<64xi32, #tpu.memory_space<smem>>
    %c1_74 = arith.constant 1 : index
    %153 = arith.index_cast %152 : i32 to index
    %c0_75 = arith.constant 0 : index
    %154 = vector.load %arg2[%c1_74, %153, %c0_75] : memref<4x1000x16xf32, #tpu.memory_space<vmem>>, vector<1x1x16xf32>
    %155 = vector.shape_cast %154 : vector<1x1x16xf32> to vector<1x16xf32>
    %c38 = arith.constant 38 : index
    %156 = memref.load %arg1[%c38] : memref<64xi32, #tpu.memory_space<smem>>
    %c2_76 = arith.constant 2 : index
    %157 = arith.index_cast %156 : i32 to index
    %c0_77 = arith.constant 0 : index
    %158 = vector.load %arg2[%c2_76, %157, %c0_77] : memref<4x1000x16xf32, #tpu.memory_space<vmem>>, vector<1x1x16xf32>
    %159 = vector.shape_cast %158 : vector<1x1x16xf32> to vector<1x16xf32>
    %c39 = arith.constant 39 : index
    %160 = memref.load %arg1[%c39] : memref<64xi32, #tpu.memory_space<smem>>
    %c3_78 = arith.constant 3 : index
    %161 = arith.index_cast %160 : i32 to index
    %c0_79 = arith.constant 0 : index
    %162 = vector.load %arg2[%c3_78, %161, %c0_79] : memref<4x1000x16xf32, #tpu.memory_space<vmem>>, vector<1x1x16xf32>
    %163 = vector.shape_cast %162 : vector<1x1x16xf32> to vector<1x16xf32>
    %164 = tpu.concatenate %135, %139, %143, %147, %151, %155, %159, %163 in 1 : vector<1x16xf32>, vector<1x16xf32>, vector<1x16xf32>, vector<1x16xf32>, vector<1x16xf32>, vector<1x16xf32>, vector<1x16xf32>, vector<1x16xf32> -> vector<1x128xf32>
    %c40 = arith.constant 40 : index
    %165 = memref.load %arg1[%c40] : memref<64xi32, #tpu.memory_space<smem>>
    %c0_80 = arith.constant 0 : index
    %166 = arith.index_cast %165 : i32 to index
    %c0_81 = arith.constant 0 : index
    %167 = vector.load %arg2[%c0_80, %166, %c0_81] : memref<4x1000x16xf32, #tpu.memory_space<vmem>>, vector<1x1x16xf32>
    %168 = vector.shape_cast %167 : vector<1x1x16xf32> to vector<1x16xf32>
    %c41 = arith.constant 41 : index
    %169 = memref.load %arg1[%c41] : memref<64xi32, #tpu.memory_space<smem>>
    %c1_82 = arith.constant 1 : index
    %170 = arith.index_cast %169 : i32 to index
    %c0_83 = arith.constant 0 : index
    %171 = vector.load %arg2[%c1_82, %170, %c0_83] : memref<4x1000x16xf32, #tpu.memory_space<vmem>>, vector<1x1x16xf32>
    %172 = vector.shape_cast %171 : vector<1x1x16xf32> to vector<1x16xf32>
    %c42 = arith.constant 42 : index
    %173 = memref.load %arg1[%c42] : memref<64xi32, #tpu.memory_space<smem>>
    %c2_84 = arith.constant 2 : index
    %174 = arith.index_cast %173 : i32 to index
    %c0_85 = arith.constant 0 : index
    %175 = vector.load %arg2[%c2_84, %174, %c0_85] : memref<4x1000x16xf32, #tpu.memory_space<vmem>>, vector<1x1x16xf32>
    %176 = vector.shape_cast %175 : vector<1x1x16xf32> to vector<1x16xf32>
    %c43 = arith.constant 43 : index
    %177 = memref.load %arg1[%c43] : memref<64xi32, #tpu.memory_space<smem>>
    %c3_86 = arith.constant 3 : index
    %178 = arith.index_cast %177 : i32 to index
    %c0_87 = arith.constant 0 : index
    %179 = vector.load %arg2[%c3_86, %178, %c0_87] : memref<4x1000x16xf32, #tpu.memory_space<vmem>>, vector<1x1x16xf32>
    %180 = vector.shape_cast %179 : vector<1x1x16xf32> to vector<1x16xf32>
    %c44 = arith.constant 44 : index
    %181 = memref.load %arg1[%c44] : memref<64xi32, #tpu.memory_space<smem>>
    %c0_88 = arith.constant 0 : index
    %182 = arith.index_cast %181 : i32 to index
    %c0_89 = arith.constant 0 : index
    %183 = vector.load %arg2[%c0_88, %182, %c0_89] : memref<4x1000x16xf32, #tpu.memory_space<vmem>>, vector<1x1x16xf32>
    %184 = vector.shape_cast %183 : vector<1x1x16xf32> to vector<1x16xf32>
    %c45 = arith.constant 45 : index
    %185 = memref.load %arg1[%c45] : memref<64xi32, #tpu.memory_space<smem>>
    %c1_90 = arith.constant 1 : index
    %186 = arith.index_cast %185 : i32 to index
    %c0_91 = arith.constant 0 : index
    %187 = vector.load %arg2[%c1_90, %186, %c0_91] : memref<4x1000x16xf32, #tpu.memory_space<vmem>>, vector<1x1x16xf32>
    %188 = vector.shape_cast %187 : vector<1x1x16xf32> to vector<1x16xf32>
    %c46 = arith.constant 46 : index
    %189 = memref.load %arg1[%c46] : memref<64xi32, #tpu.memory_space<smem>>
    %c2_92 = arith.constant 2 : index
    %190 = arith.index_cast %189 : i32 to index
    %c0_93 = arith.constant 0 : index
    %191 = vector.load %arg2[%c2_92, %190, %c0_93] : memref<4x1000x16xf32, #tpu.memory_space<vmem>>, vector<1x1x16xf32>
    %192 = vector.shape_cast %191 : vector<1x1x16xf32> to vector<1x16xf32>
    %c47 = arith.constant 47 : index
    %193 = memref.load %arg1[%c47] : memref<64xi32, #tpu.memory_space<smem>>
    %c3_94 = arith.constant 3 : index
    %194 = arith.index_cast %193 : i32 to index
    %c0_95 = arith.constant 0 : index
    %195 = vector.load %arg2[%c3_94, %194, %c0_95] : memref<4x1000x16xf32, #tpu.memory_space<vmem>>, vector<1x1x16xf32>
    %196 = vector.shape_cast %195 : vector<1x1x16xf32> to vector<1x16xf32>
    %197 = tpu.concatenate %168, %172, %176, %180, %184, %188, %192, %196 in 1 : vector<1x16xf32>, vector<1x16xf32>, vector<1x16xf32>, vector<1x16xf32>, vector<1x16xf32>, vector<1x16xf32>, vector<1x16xf32>, vector<1x16xf32> -> vector<1x128xf32>
    %c48 = arith.constant 48 : index
    %198 = memref.load %arg1[%c48] : memref<64xi32, #tpu.memory_space<smem>>
    %c0_96 = arith.constant 0 : index
    %199 = arith.index_cast %198 : i32 to index
    %c0_97 = arith.constant 0 : index
    %200 = vector.load %arg2[%c0_96, %199, %c0_97] : memref<4x1000x16xf32, #tpu.memory_space<vmem>>, vector<1x1x16xf32>
    %201 = vector.shape_cast %200 : vector<1x1x16xf32> to vector<1x16xf32>
    %c49 = arith.constant 49 : index
    %202 = memref.load %arg1[%c49] : memref<64xi32, #tpu.memory_space<smem>>
    %c1_98 = arith.constant 1 : index
    %203 = arith.index_cast %202 : i32 to index
    %c0_99 = arith.constant 0 : index
    %204 = vector.load %arg2[%c1_98, %203, %c0_99] : memref<4x1000x16xf32, #tpu.memory_space<vmem>>, vector<1x1x16xf32>
    %205 = vector.shape_cast %204 : vector<1x1x16xf32> to vector<1x16xf32>
    %c50 = arith.constant 50 : index
    %206 = memref.load %arg1[%c50] : memref<64xi32, #tpu.memory_space<smem>>
    %c2_100 = arith.constant 2 : index
    %207 = arith.index_cast %206 : i32 to index
    %c0_101 = arith.constant 0 : index
    %208 = vector.load %arg2[%c2_100, %207, %c0_101] : memref<4x1000x16xf32, #tpu.memory_space<vmem>>, vector<1x1x16xf32>
    %209 = vector.shape_cast %208 : vector<1x1x16xf32> to vector<1x16xf32>
    %c51 = arith.constant 51 : index
    %210 = memref.load %arg1[%c51] : memref<64xi32, #tpu.memory_space<smem>>
    %c3_102 = arith.constant 3 : index
    %211 = arith.index_cast %210 : i32 to index
    %c0_103 = arith.constant 0 : index
    %212 = vector.load %arg2[%c3_102, %211, %c0_103] : memref<4x1000x16xf32, #tpu.memory_space<vmem>>, vector<1x1x16xf32>
    %213 = vector.shape_cast %212 : vector<1x1x16xf32> to vector<1x16xf32>
    %c52 = arith.constant 52 : index
    %214 = memref.load %arg1[%c52] : memref<64xi32, #tpu.memory_space<smem>>
    %c0_104 = arith.constant 0 : index
    %215 = arith.index_cast %214 : i32 to index
    %c0_105 = arith.constant 0 : index
    %216 = vector.load %arg2[%c0_104, %215, %c0_105] : memref<4x1000x16xf32, #tpu.memory_space<vmem>>, vector<1x1x16xf32>
    %217 = vector.shape_cast %216 : vector<1x1x16xf32> to vector<1x16xf32>
    %c53 = arith.constant 53 : index
    %218 = memref.load %arg1[%c53] : memref<64xi32, #tpu.memory_space<smem>>
    %c1_106 = arith.constant 1 : index
    %219 = arith.index_cast %218 : i32 to index
    %c0_107 = arith.constant 0 : index
    %220 = vector.load %arg2[%c1_106, %219, %c0_107] : memref<4x1000x16xf32, #tpu.memory_space<vmem>>, vector<1x1x16xf32>
    %221 = vector.shape_cast %220 : vector<1x1x16xf32> to vector<1x16xf32>
    %c54 = arith.constant 54 : index
    %222 = memref.load %arg1[%c54] : memref<64xi32, #tpu.memory_space<smem>>
    %c2_108 = arith.constant 2 : index
    %223 = arith.index_cast %222 : i32 to index
    %c0_109 = arith.constant 0 : index
    %224 = vector.load %arg2[%c2_108, %223, %c0_109] : memref<4x1000x16xf32, #tpu.memory_space<vmem>>, vector<1x1x16xf32>
    %225 = vector.shape_cast %224 : vector<1x1x16xf32> to vector<1x16xf32>
    %c55 = arith.constant 55 : index
    %226 = memref.load %arg1[%c55] : memref<64xi32, #tpu.memory_space<smem>>
    %c3_110 = arith.constant 3 : index
    %227 = arith.index_cast %226 : i32 to index
    %c0_111 = arith.constant 0 : index
    %228 = vector.load %arg2[%c3_110, %227, %c0_111] : memref<4x1000x16xf32, #tpu.memory_space<vmem>>, vector<1x1x16xf32>
    %229 = vector.shape_cast %228 : vector<1x1x16xf32> to vector<1x16xf32>
    %230 = tpu.concatenate %201, %205, %209, %213, %217, %221, %225, %229 in 1 : vector<1x16xf32>, vector<1x16xf32>, vector<1x16xf32>, vector<1x16xf32>, vector<1x16xf32>, vector<1x16xf32>, vector<1x16xf32>, vector<1x16xf32> -> vector<1x128xf32>
    %c56 = arith.constant 56 : index
    %231 = memref.load %arg1[%c56] : memref<64xi32, #tpu.memory_space<smem>>
    %c0_112 = arith.constant 0 : index
    %232 = arith.index_cast %231 : i32 to index
    %c0_113 = arith.constant 0 : index
    %233 = vector.load %arg2[%c0_112, %232, %c0_113] : memref<4x1000x16xf32, #tpu.memory_space<vmem>>, vector<1x1x16xf32>
    %234 = vector.shape_cast %233 : vector<1x1x16xf32> to vector<1x16xf32>
    %c57 = arith.constant 57 : index
    %235 = memref.load %arg1[%c57] : memref<64xi32, #tpu.memory_space<smem>>
    %c1_114 = arith.constant 1 : index
    %236 = arith.index_cast %235 : i32 to index
    %c0_115 = arith.constant 0 : index
    %237 = vector.load %arg2[%c1_114, %236, %c0_115] : memref<4x1000x16xf32, #tpu.memory_space<vmem>>, vector<1x1x16xf32>
    %238 = vector.shape_cast %237 : vector<1x1x16xf32> to vector<1x16xf32>
    %c58 = arith.constant 58 : index
    %239 = memref.load %arg1[%c58] : memref<64xi32, #tpu.memory_space<smem>>
    %c2_116 = arith.constant 2 : index
    %240 = arith.index_cast %239 : i32 to index
    %c0_117 = arith.constant 0 : index
    %241 = vector.load %arg2[%c2_116, %240, %c0_117] : memref<4x1000x16xf32, #tpu.memory_space<vmem>>, vector<1x1x16xf32>
    %242 = vector.shape_cast %241 : vector<1x1x16xf32> to vector<1x16xf32>
    %c59 = arith.constant 59 : index
    %243 = memref.load %arg1[%c59] : memref<64xi32, #tpu.memory_space<smem>>
    %c3_118 = arith.constant 3 : index
    %244 = arith.index_cast %243 : i32 to index
    %c0_119 = arith.constant 0 : index
    %245 = vector.load %arg2[%c3_118, %244, %c0_119] : memref<4x1000x16xf32, #tpu.memory_space<vmem>>, vector<1x1x16xf32>
    %246 = vector.shape_cast %245 : vector<1x1x16xf32> to vector<1x16xf32>
    %c60 = arith.constant 60 : index
    %247 = memref.load %arg1[%c60] : memref<64xi32, #tpu.memory_space<smem>>
    %c0_120 = arith.constant 0 : index
    %248 = arith.index_cast %247 : i32 to index
    %c0_121 = arith.constant 0 : index
    %249 = vector.load %arg2[%c0_120, %248, %c0_121] : memref<4x1000x16xf32, #tpu.memory_space<vmem>>, vector<1x1x16xf32>
    %250 = vector.shape_cast %249 : vector<1x1x16xf32> to vector<1x16xf32>
    %c61 = arith.constant 61 : index
    %251 = memref.load %arg1[%c61] : memref<64xi32, #tpu.memory_space<smem>>
    %c1_122 = arith.constant 1 : index
    %252 = arith.index_cast %251 : i32 to index
    %c0_123 = arith.constant 0 : index
    %253 = vector.load %arg2[%c1_122, %252, %c0_123] : memref<4x1000x16xf32, #tpu.memory_space<vmem>>, vector<1x1x16xf32>
    %254 = vector.shape_cast %253 : vector<1x1x16xf32> to vector<1x16xf32>
    %c62 = arith.constant 62 : index
    %255 = memref.load %arg1[%c62] : memref<64xi32, #tpu.memory_space<smem>>
    %c2_124 = arith.constant 2 : index
    %256 = arith.index_cast %255 : i32 to index
    %c0_125 = arith.constant 0 : index
    %257 = vector.load %arg2[%c2_124, %256, %c0_125] : memref<4x1000x16xf32, #tpu.memory_space<vmem>>, vector<1x1x16xf32>
    %258 = vector.shape_cast %257 : vector<1x1x16xf32> to vector<1x16xf32>
    %c63 = arith.constant 63 : index
    %259 = memref.load %arg1[%c63] : memref<64xi32, #tpu.memory_space<smem>>
    %c3_126 = arith.constant 3 : index
    %260 = arith.index_cast %259 : i32 to index
    %c0_127 = arith.constant 0 : index
    %261 = vector.load %arg2[%c3_126, %260, %c0_127] : memref<4x1000x16xf32, #tpu.memory_space<vmem>>, vector<1x1x16xf32>
    %262 = vector.shape_cast %261 : vector<1x1x16xf32> to vector<1x16xf32>
    %263 = tpu.concatenate %234, %238, %242, %246, %250, %254, %258, %262 in 1 : vector<1x16xf32>, vector<1x16xf32>, vector<1x16xf32>, vector<1x16xf32>, vector<1x16xf32>, vector<1x16xf32>, vector<1x16xf32>, vector<1x16xf32> -> vector<1x128xf32>
    %264 = tpu.concatenate %32, %65, %98, %131, %164, %197, %230, %263 in 0 : vector<1x128xf32>, vector<1x128xf32>, vector<1x128xf32>, vector<1x128xf32>, vector<1x128xf32>, vector<1x128xf32>, vector<1x128xf32>, vector<1x128xf32> -> vector<8x128xf32>
    %c0_128 = arith.constant 0 : index
    %c0_129 = arith.constant 0 : index
    %265 = vector.load %arg3[%c0_128, %c0_129] : memref<8x128xf32, #tpu.memory_space<vmem>>, vector<8x128xf32>
    tpu.vector_store %arg3[%c0_128, %c0_129], %264 {strides = array<i32>} : memref<8x128xf32, #tpu.memory_space<vmem>>, vector<8x128xf32>,
    return
  }
  func.func @transform_0(%arg0: i32, %arg1: memref<64xi32, #tpu.memory_space<smem>>) -> (i32, i32, i32) {
    %c0_i32 = arith.constant 0 : i32
    %c0_i32_0 = arith.constant 0 : i32
    %c0_i32_1 = arith.constant 0 : i32
    %c0_i32_2 = arith.constant 0 : i32
    return %c0_i32, %c0_i32_0, %c0_i32_1 : i32, i32, i32
  }
  func.func @transform_1(%arg0: i32, %arg1: memref<64xi32, #tpu.memory_space<smem>>) -> (i32, i32) {
    %c0_i32 = arith.constant 0 : i32
    %c0_i32_0 = arith.constant 0 : i32
    %c0_i32_1 = arith.constant 0 : i32
    return %c0_i32, %c0_i32_0 : i32, i32
  }
}

</mosaic_0001>

<llo_original>
// kernel: tpu_custom_call.1
$region0: #{tpu_custom_call.1}
  #allocation0 [shape = 'u32[]', space=smem, size = 0x4, offset = 0x4, fixed_abs, tag = 'smem constant byte address 0x4 - core index']
  #allocation1 [shape = 'u32[144,128]{1,0:T(1,128)}', space=vmem, size = 0x12000, scoped, tag = 'internal scratch']
  #allocation2 [shape = 's32[1]{0}', space=sflag, size = 0x4, scoped, tag = 'scoped memory for tpu_custom_call.1']
  #allocation3 [shape = 'u8[512]{0}', space=smem, size = 0x200, scoped, tag = 'prefetched SMEM operand 0']
  %s0 = inlined_call_operand.vmem [shape: s32[64], index: 0, kind: input, shape index: {}]
  %s1 = inlined_call_operand.vmem [shape: f32[4,1000,16], index: 1, kind: input, shape index: {}]
  %s2 = inlined_call_operand.hbm [shape: f32[8,128], index: 2, kind: output, shape index: {}]
  %s3 = sld [smem:[#allocation0]]
  $region14: #{tpu_custom_call.1} parent=0
    _
  %s5 = ssub.s32 1, %s3
  %s6 = scalar_select 0, %s5, %s3
  %s7 = sshll.u32 %s0, 4
  %s8 = int_to_ptr.vmem [resolvable:$true] %s7
  %10 = dma.vmem_to_smem %s8, 16, [#allocation3], [#allocation2]
  %11 = dma.done [#allocation2], 16
  %12 = sfence
  $region1: #{tpu_custom_call.1} parent=0
    #allocation4 [shape = 'u8[4096]{0}', space=vmem, size = 0x1000, scoped, tag = 'output window, operand 0, single buffered']
    #allocation5 [shape = 's32[1]{0}', space=sflag, size = 0x4, scoped, tag = 'scoped memory for tpu_custom_call.1']
    %13 = vsyncpa [#allocation5], 0
    // Predicated region
    $region2: #{tpu_custom_call.1} parent=1 // pred_check
      _
    $region3: #{tpu_custom_call.1} parent=1 // pred_check_branch
      %15 = sbr.rel (0) target = $region5
    $region4: #{tpu_custom_call.1} parent=1 // pred_region
      _
    $region5: #{tpu_custom_call.1} parent=1 // pred_fallthru
      _
    %s16 = sld [smem:[#allocation3]]
    %s17 = scalar_lea.vmem %s1, %s16
    %v18 = vld [vmem:[%s17] sm:$0x1]
    %s19 = sld [smem:[#allocation3 + $0x1]]
    %s20 = sadd.s32 %s19, 1000
    %s21 = scalar_lea.vmem %s1, %s20
    %v22 = vld [vmem:[%s21] sm:$0x1]
    %s23 = sld [smem:[#allocation3 + $0x2]]
    %s24 = sadd.s32 %s23, 2000
    %s25 = scalar_lea.vmem %s1, %s24
    %v26 = vld [vmem:[%s25] sm:$0x1]
    %s27 = sld [smem:[#allocation3 + $0x3]]
    %s28 = sadd.s32 %s27, 3000
    %s29 = scalar_lea.vmem %s1, %s28
    %v30 = vld [vmem:[%s29] sm:$0x1]
    %s31 = sld [smem:[#allocation3 + $0x4]]
    %s32 = scalar_lea.vmem %s1, %s31
    %v33 = vld [vmem:[%s32] sm:$0x1]
    %s34 = sld [smem:[#allocation3 + $0x5]]
    %s35 = sadd.s32 %s34, 1000
    %s36 = scalar_lea.vmem %s1, %s35
    %v37 = vld [vmem:[%s36] sm:$0x1]
    %s38 = sld [smem:[#allocation3 + $0x6]]
    %s39 = sadd.s32 %s38, 2000
    %s40 = scalar_lea.vmem %s1, %s39
    %v41 = vld [vmem:[%s40] sm:$0x1]
    %s42 = sld [smem:[#allocation3 + $0x7]]
    %s43 = sadd.s32 %s42, 3000
    %s44 = scalar_lea.vmem %s1, %s43
    %v45 = vld [vmem:[%s44] sm:$0x1]
    %47 = vrot.lane.b32.xlu0 %v22, 16
    %v48 = vpop.permute.xlu0 %47
    %51 = vrot.lane.b32.xlu0 %v26, 32
    %v52 = vpop.permute.xlu0 %51
    %55 = vrot.lane.b32.xlu0 %v30, 48
    %v56 = vpop.permute.xlu0 %55
    %59 = vrot.lane.b32.xlu0 %v33, 64
    %v60 = vpop.permute.xlu0 %59
    %63 = vrot.lane.b32.xlu0 %v37, 80
    %v64 = vpop.permute.xlu0 %63
    %67 = vrot.lane.b32.xlu0 %v41, 96
    %v68 = vpop.permute.xlu0 %67
    %71 = vrot.lane.b32.xlu0 %v45, 112
    %v72 = vpop.permute.xlu0 %71
    %vm74 = vcmask 130048
    %v75 = vsel %vm74, %v18, %v48
    %vm76 = vcmask 261120
    %v77 = vsel %vm76, %v75, %v52
    %vm78 = vcmask 392192
    %v79 = vsel %vm78, %v77, %v56
    %vm80 = vcmask 523264
    %v81 = vsel %vm80, %v79, %v60
    %vm82 = vcmask 654336
    %v83 = vsel %vm82, %v81, %v64
    %vm84 = vcmask 785408
    %v85 = vsel %vm84, %v83, %v68
    %vm86 = vcmask 916480
    %v87 = vsel %vm86, %v85, %v72
    %s88 = sld [smem:[#allocation3 + $0x8]]
    %s89 = scalar_lea.vmem %s1, %s88
    %v90 = vld [vmem:[%s89] sm:$0x1]
    %s91 = sld [smem:[#allocation3 + $0x9]]
    %s92 = sadd.s32 %s91, 1000
    %s93 = scalar_lea.vmem %s1, %s92
    %v94 = vld [vmem:[%s93] sm:$0x1]
    %s95 = sld [smem:[#allocation3 + $0xa]]
    %s96 = sadd.s32 %s95, 2000
    %s97 = scalar_lea.vmem %s1, %s96
    %v98 = vld [vmem:[%s97] sm:$0x1]
    %s99 = sld [smem:[#allocation3 + $0xb]]
    %s100 = sadd.s32 %s99, 3000
    %s101 = scalar_lea.vmem %s1, %s100
    %v102 = vld [vmem:[%s101] sm:$0x1]
    %s103 = sld [smem:[#allocation3 + $0xc]]
    %s104 = scalar_lea.vmem %s1, %s103
    %v105 = vld [vmem:[%s104] sm:$0x1]
    %s106 = sld [smem:[#allocation3 + $0xd]]
    %s107 = sadd.s32 %s106, 1000
    %s108 = scalar_lea.vmem %s1, %s107
    %v109 = vld [vmem:[%s108] sm:$0x1]
    %s110 = sld [smem:[#allocation3 + $0xe]]
    %s111 = sadd.s32 %s110, 2000
    %s112 = scalar_lea.vmem %s1, %s111
    %v113 = vld [vmem:[%s112] sm:$0x1]
    %s114 = sld [smem:[#allocation3 + $0xf]]
    %s115 = sadd.s32 %s114, 3000
    %s116 = scalar_lea.vmem %s1, %s115
    %v117 = vld [vmem:[%s116] sm:$0x1]
    %119 = vrot.lane.b32.xlu0 %v94, 16
    %v120 = vpop.permute.xlu0 %119
    %123 = vrot.lane.b32.xlu0 %v98, 32
    %v124 = vpop.permute.xlu0 %123
    %127 = vrot.lane.b32.xlu0 %v102, 48
    %v128 = vpop.permute.xlu0 %127
    %131 = vrot.lane.b32.xlu0 %v105, 64
    %v132 = vpop.permute.xlu0 %131
    %135 = vrot.lane.b32.xlu0 %v109, 80
    %v136 = vpop.permute.xlu0 %135
    %139 = vrot.lane.b32.xlu0 %v113, 96
    %v140 = vpop.permute.xlu0 %139
    %143 = vrot.lane.b32.xlu0 %v117, 112
    %v144 = vpop.permute.xlu0 %143
    %v146 = vsel %vm74, %v90, %v120
    %v147 = vsel %vm76, %v146, %v124
    %v148 = vsel %vm78, %v147, %v128
    %v149 = vsel %vm80, %v148, %v132
    %v150 = vsel %vm82, %v149, %v136
    %v151 = vsel %vm84, %v150, %v140
    %v152 = vsel %vm86, %v151, %v144
    %s153 = sld [smem:[#allocation3 + $0x10]]
    %s154 = scalar_lea.vmem %s1, %s153
    %v155 = vld [vmem:[%s154] sm:$0x1]
    %s156 = sld [smem:[#allocation3 + $0x11]]
    %s157 = sadd.s32 %s156, 1000
    %s158 = scalar_lea.vmem %s1, %s157
    %v159 = vld [vmem:[%s158] sm:$0x1]
    %s160 = sld [smem:[#allocation3 + $0x12]]
    %s161 = sadd.s32 %s160, 2000
    %s162 = scalar_lea.vmem %s1, %s161
    %v163 = vld [vmem:[%s162] sm:$0x1]
    %s164 = sld [smem:[#allocation3 + $0x13]]
    %s165 = sadd.s32 %s164, 3000
    %s166 = scalar_lea.vmem %s1, %s165
    %v167 = vld [vmem:[%s166] sm:$0x1]
    %s168 = sld [smem:[#allocation3 + $0x14]]
    %s169 = scalar_lea.vmem %s1, %s168
    %v170 = vld [vmem:[%s169] sm:$0x1]
    %s171 = sld [smem:[#allocation3 + $0x15]]
    %s172 = sadd.s32 %s171, 1000
    %s173 = scalar_lea.vmem %s1, %s172
    %v174 = vld [vmem:[%s173] sm:$0x1]
    %s175 = sld [smem:[#allocation3 + $0x16]]
    %s176 = sadd.s32 %s175, 2000
    %s177 = scalar_lea.vmem %s1, %s176
    %v178 = vld [vmem:[%s177] sm:$0x1]
    %s179 = sld [smem:[#allocation3 + $0x17]]
    %s180 = sadd.s32 %s179, 3000
    %s181 = scalar_lea.vmem %s1, %s180
    %v182 = vld [vmem:[%s181] sm:$0x1]
    %184 = vrot.lane.b32.xlu0 %v159, 16
    %v185 = vpop.permute.xlu0 %184
    %188 = vrot.lane.b32.xlu0 %v163, 32
    %v189 = vpop.permute.xlu0 %188
    %192 = vrot.lane.b32.xlu0 %v167, 48
    %v193 = vpop.permute.xlu0 %192
    %196 = vrot.lane.b32.xlu0 %v170, 64
    %v197 = vpop.permute.xlu0 %196
    %200 = vrot.lane.b32.xlu0 %v174, 80
    %v201 = vpop.permute.xlu0 %200
    %204 = vrot.lane.b32.xlu0 %v178, 96
    %v205 = vpop.permute.xlu0 %204
    %208 = vrot.lane.b32.xlu0 %v182, 112
    %v209 = vpop.permute.xlu0 %208
    %v211 = vsel %vm74, %v155, %v185
    %v212 = vsel %vm76, %v211, %v189
    %v213 = vsel %vm78, %v212, %v193
    %v214 = vsel %vm80, %v213, %v197
    %v215 = vsel %vm82, %v214, %v201
    %v216 = vsel %vm84, %v215, %v205
    %v217 = vsel %vm86, %v216, %v209
    %s218 = sld [smem:[#allocation3 + $0x18]]
    %s219 = scalar_lea.vmem %s1, %s218
    %v220 = vld [vmem:[%s219] sm:$0x1]
    %s221 = sld [smem:[#allocation3 + $0x19]]
    %s222 = sadd.s32 %s221, 1000
    %s223 = scalar_lea.vmem %s1, %s222
    %v224 = vld [vmem:[%s223] sm:$0x1]
    %s225 = sld [smem:[#allocation3 + $0x1a]]
    %s226 = sadd.s32 %s225, 2000
    %s227 = scalar_lea.vmem %s1, %s226
    %v228 = vld [vmem:[%s227] sm:$0x1]
    %s229 = sld [smem:[#allocation3 + $0x1b]]
    %s230 = sadd.s32 %s229, 3000
    %s231 = scalar_lea.vmem %s1, %s230
    %v232 = vld [vmem:[%s231] sm:$0x1]
    %s233 = sld [smem:[#allocation3 + $0x1c]]
    %s234 = scalar_lea.vmem %s1, %s233
    %v235 = vld [vmem:[%s234] sm:$0x1]
    %s236 = sld [smem:[#allocation3 + $0x1d]]
    %s237 = sadd.s32 %s236, 1000
    %s238 = scalar_lea.vmem %s1, %s237
    %v239 = vld [vmem:[%s238] sm:$0x1]
    %s240 = sld [smem:[#allocation3 + $0x1e]]
    %s241 = sadd.s32 %s240, 2000
    %s242 = scalar_lea.vmem %s1, %s241
    %v243 = vld [vmem:[%s242] sm:$0x1]
    %s244 = sld [smem:[#allocation3 + $0x1f]]
    %s245 = sadd.s32 %s244, 3000
    %s246 = scalar_lea.vmem %s1, %s245
    %v247 = vld [vmem:[%s246] sm:$0x1]
    %249 = vrot.lane.b32.xlu0 %v224, 16
    %v250 = vpop.permute.xlu0 %249
    %253 = vrot.lane.b32.xlu0 %v228, 32
    %v254 = vpop.permute.xlu0 %253
    %257 = vrot.lane.b32.xlu0 %v232, 48
    %v258 = vpop.permute.xlu0 %257
    %261 = vrot.lane.b32.xlu0 %v235, 64
    %v262 = vpop.permute.xlu0 %261
    %265 = vrot.lane.b32.xlu0 %v239, 80
    %v266 = vpop.permute.xlu0 %265
    %269 = vrot.lane.b32.xlu0 %v243, 96
    %v270 = vpop.permute.xlu0 %269
    %273 = vrot.lane.b32.xlu0 %v247, 112
    %v274 = vpop.permute.xlu0 %273
    %v276 = vsel %vm74, %v220, %v250
    %v277 = vsel %vm76, %v276, %v254
    %v278 = vsel %vm78, %v277, %v258
    %v279 = vsel %vm80, %v278, %v262
    %v280 = vsel %vm82, %v279, %v266
    %v281 = vsel %vm84, %v280, %v270
    %v282 = vsel %vm86, %v281, %v274
    %s283 = sld [smem:[#allocation3 + $0x20]]
    %s284 = scalar_lea.vmem %s1, %s283
    %v285 = vld [vmem:[%s284] sm:$0x1]
    %s286 = sld [smem:[#allocation3 + $0x21]]
    %s287 = sadd.s32 %s286, 1000
    %s288 = scalar_lea.vmem %s1, %s287
    %v289 = vld [vmem:[%s288] sm:$0x1]
    %s290 = sld [smem:[#allocation3 + $0x22]]
    %s291 = sadd.s32 %s290, 2000
    %s292 = scalar_lea.vmem %s1, %s291
    %v293 = vld [vmem:[%s292] sm:$0x1]
    %s294 = sld [smem:[#allocation3 + $0x23]]
    %s295 = sadd.s32 %s294, 3000
    %s296 = scalar_lea.vmem %s1, %s295
    %v297 = vld [vmem:[%s296] sm:$0x1]
    %s298 = sld [smem:[#allocation3 + $0x24]]
    %s299 = scalar_lea.vmem %s1, %s298
    %v300 = vld [vmem:[%s299] sm:$0x1]
    %s301 = sld [smem:[#allocation3 + $0x25]]
    %s302 = sadd.s32 %s301, 1000
    %s303 = scalar_lea.vmem %s1, %s302
    %v304 = vld [vmem:[%s303] sm:$0x1]
    %s305 = sld [smem:[#allocation3 + $0x26]]
    %s306 = sadd.s32 %s305, 2000
    %s307 = scalar_lea.vmem %s1, %s306
    %v308 = vld [vmem:[%s307] sm:$0x1]
    %s309 = sld [smem:[#allocation3 + $0x27]]
    %s310 = sadd.s32 %s309, 3000
    %s311 = scalar_lea.vmem %s1, %s310
    %v312 = vld [vmem:[%s311] sm:$0x1]
    %314 = vrot.lane.b32.xlu0 %v289, 16
    %v315 = vpop.permute.xlu0 %314
    %318 = vrot.lane.b32.xlu0 %v293, 32
    %v319 = vpop.permute.xlu0 %318
    %322 = vrot.lane.b32.xlu0 %v297, 48
    %v323 = vpop.permute.xlu0 %322
    %326 = vrot.lane.b32.xlu0 %v300, 64
    %v327 = vpop.permute.xlu0 %326
    %330 = vrot.lane.b32.xlu0 %v304, 80
    %v331 = vpop.permute.xlu0 %330
    %334 = vrot.lane.b32.xlu0 %v308, 96
    %v335 = vpop.permute.xlu0 %334
    %338 = vrot.lane.b32.xlu0 %v312, 112
    %v339 = vpop.permute.xlu0 %338
    %v341 = vsel %vm74, %v285, %v315
    %v342 = vsel %vm76, %v341, %v319
    %v343 = vsel %vm78, %v342, %v323
    %v344 = vsel %vm80, %v343, %v327
    %v345 = vsel %vm82, %v344, %v331
    %v346 = vsel %vm84, %v345, %v335
    %v347 = vsel %vm86, %v346, %v339
    %s348 = sld [smem:[#allocation3 + $0x28]]
    %s349 = scalar_lea.vmem %s1, %s348
    %v350 = vld [vmem:[%s349] sm:$0x1]
    %s351 = sld [smem:[#allocation3 + $0x29]]
    %s352 = sadd.s32 %s351, 1000
    %s353 = scalar_lea.vmem %s1, %s352
    %v354 = vld [vmem:[%s353] sm:$0x1]
    %s355 = sld [smem:[#allocation3 + $0x2a]]
    %s356 = sadd.s32 %s355, 2000
    %s357 = scalar_lea.vmem %s1, %s356
    %v358 = vld [vmem:[%s357] sm:$0x1]
    %s359 = sld [smem:[#allocation3 + $0x2b]]
    %s360 = sadd.s32 %s359, 3000
    %s361 = scalar_lea.vmem %s1, %s360
    %v362 = vld [vmem:[%s361] sm:$0x1]
    %s363 = sld [smem:[#allocation3 + $0x2c]]
    %s364 = scalar_lea.vmem %s1, %s363
    %v365 = vld [vmem:[%s364] sm:$0x1]
    %s366 = sld [smem:[#allocation3 + $0x2d]]
    %s367 = sadd.s32 %s366, 1000
    %s368 = scalar_lea.vmem %s1, %s367
    %v369 = vld [vmem:[%s368] sm:$0x1]
    %s370 = sld [smem:[#allocation3 + $0x2e]]
    %s371 = sadd.s32 %s370, 2000
    %s372 = scalar_lea.vmem %s1, %s371
    %v373 = vld [vmem:[%s372] sm:$0x1]
    %s374 = sld [smem:[#allocation3 + $0x2f]]
    %s375 = sadd.s32 %s374, 3000
    %s376 = scalar_lea.vmem %s1, %s375
    %v377 = vld [vmem:[%s376] sm:$0x1]
    %379 = vrot.lane.b32.xlu0 %v354, 16
    %v380 = vpop.permute.xlu0 %379
    %383 = vrot.lane.b32.xlu0 %v358, 32
    %v384 = vpop.permute.xlu0 %383
    %387 = vrot.lane.b32.xlu0 %v362, 48
    %v388 = vpop.permute.xlu0 %387
    %391 = vrot.lane.b32.xlu0 %v365, 64
    %v392 = vpop.permute.xlu0 %391
    %395 = vrot.lane.b32.xlu0 %v369, 80
    %v396 = vpop.permute.xlu0 %395
    %399 = vrot.lane.b32.xlu0 %v373, 96
    %v400 = vpop.permute.xlu0 %399
    %403 = vrot.lane.b32.xlu0 %v377, 112
    %v404 = vpop.permute.xlu0 %403
    %v406 = vsel %vm74, %v350, %v380
    %v407 = vsel %vm76, %v406, %v384
    %v408 = vsel %vm78, %v407, %v388
    %v409 = vsel %vm80, %v408, %v392
    %v410 = vsel %vm82, %v409, %v396
    %v411 = vsel %vm84, %v410, %v400
    %v412 = vsel %vm86, %v411, %v404
    %s413 = sld [smem:[#allocation3 + $0x30]]
    %s414 = scalar_lea.vmem %s1, %s413
    %v415 = vld [vmem:[%s414] sm:$0x1]
    %s416 = sld [smem:[#allocation3 + $0x31]]
    %s417 = sadd.s32 %s416, 1000
    %s418 = scalar_lea.vmem %s1, %s417
    %v419 = vld [vmem:[%s418] sm:$0x1]
    %s420 = sld [smem:[#allocation3 + $0x32]]
    %s421 = sadd.s32 %s420, 2000
    %s422 = scalar_lea.vmem %s1, %s421
    %v423 = vld [vmem:[%s422] sm:$0x1]
    %s424 = sld [smem:[#allocation3 + $0x33]]
    %s425 = sadd.s32 %s424, 3000
    %s426 = scalar_lea.vmem %s1, %s425
    %v427 = vld [vmem:[%s426] sm:$0x1]
    %s428 = sld [smem:[#allocation3 + $0x34]]
    %s429 = scalar_lea.vmem %s1, %s428
    %v430 = vld [vmem:[%s429] sm:$0x1]
    %s431 = sld [smem:[#allocation3 + $0x35]]
    %s432 = sadd.s32 %s431, 1000
    %s433 = scalar_lea.vmem %s1, %s432
    %v434 = vld [vmem:[%s433] sm:$0x1]
    %s435 = sld [smem:[#allocation3 + $0x36]]
    %s436 = sadd.s32 %s435, 2000
    %s437 = scalar_lea.vmem %s1, %s436
    %v438 = vld [vmem:[%s437] sm:$0x1]
    %s439 = sld [smem:[#allocation3 + $0x37]]
    %s440 = sadd.s32 %s439, 3000
    %s441 = scalar_lea.vmem %s1, %s440
    %v442 = vld [vmem:[%s441] sm:$0x1]
    %444 = vrot.lane.b32.xlu0 %v419, 16
    %v445 = vpop.permute.xlu0 %444
    %448 = vrot.lane.b32.xlu0 %v423, 32
    %v449 = vpop.permute.xlu0 %448
    %452 = vrot.lane.b32.xlu0 %v427, 48
    %v453 = vpop.permute.xlu0 %452
    %456 = vrot.lane.b32.xlu0 %v430, 64
    %v457 = vpop.permute.xlu0 %456
    %460 = vrot.lane.b32.xlu0 %v434, 80
    %v461 = vpop.permute.xlu0 %460
    %464 = vrot.lane.b32.xlu0 %v438, 96
    %v465 = vpop.permute.xlu0 %464
    %468 = vrot.lane.b32.xlu0 %v442, 112
    %v469 = vpop.permute.xlu0 %468
    %v471 = vsel %vm74, %v415, %v445
    %v472 = vsel %vm76, %v471, %v449
    %v473 = vsel %vm78, %v472, %v453
    %v474 = vsel %vm80, %v473, %v457
    %v475 = vsel %vm82, %v474, %v461
    %v476 = vsel %vm84, %v475, %v465
    %v477 = vsel %vm86, %v476, %v469
    %s478 = sld [smem:[#allocation3 + $0x38]]
    %s479 = scalar_lea.vmem %s1, %s478
    %v480 = vld [vmem:[%s479] sm:$0x1]
    %s481 = sld [smem:[#allocation3 + $0x39]]
    %s482 = sadd.s32 %s481, 1000
    %s483 = scalar_lea.vmem %s1, %s482
    %v484 = vld [vmem:[%s483] sm:$0x1]
    %s485 = sld [smem:[#allocation3 + $0x3a]]
    %s486 = sadd.s32 %s485, 2000
    %s487 = scalar_lea.vmem %s1, %s486
    %v488 = vld [vmem:[%s487] sm:$0x1]
    %s489 = sld [smem:[#allocation3 + $0x3b]]
    %s490 = sadd.s32 %s489, 3000
    %s491 = scalar_lea.vmem %s1, %s490
    %v492 = vld [vmem:[%s491] sm:$0x1]
    %s493 = sld [smem:[#allocation3 + $0x3c]]
    %s494 = scalar_lea.vmem %s1, %s493
    %v495 = vld [vmem:[%s494] sm:$0x1]
    %s496 = sld [smem:[#allocation3 + $0x3d]]
    %s497 = sadd.s32 %s496, 1000
    %s498 = scalar_lea.vmem %s1, %s497
    %v499 = vld [vmem:[%s498] sm:$0x1]
    %s500 = sld [smem:[#allocation3 + $0x3e]]
    %s501 = sadd.s32 %s500, 2000
    %s502 = scalar_lea.vmem %s1, %s501
    %v503 = vld [vmem:[%s502] sm:$0x1]
    %s504 = sld [smem:[#allocation3 + $0x3f]]
    %s505 = sadd.s32 %s504, 3000
    %s506 = scalar_lea.vmem %s1, %s505
    %v507 = vld [vmem:[%s506] sm:$0x1]
    %509 = vrot.lane.b32.xlu0 %v484, 16
    %v510 = vpop.permute.xlu0 %509
    %513 = vrot.lane.b32.xlu0 %v488, 32
    %v514 = vpop.permute.xlu0 %513
    %517 = vrot.lane.b32.xlu0 %v492, 48
    %v518 = vpop.permute.xlu0 %517
    %521 = vrot.lane.b32.xlu0 %v495, 64
    %v522 = vpop.permute.xlu0 %521
    %525 = vrot.lane.b32.xlu0 %v499, 80
    %v526 = vpop.permute.xlu0 %525
    %529 = vrot.lane.b32.xlu0 %v503, 96
    %v530 = vpop.permute.xlu0 %529
    %533 = vrot.lane.b32.xlu0 %v507, 112
    %v534 = vpop.permute.xlu0 %533
    %v536 = vsel %vm74, %v480, %v510
    %v537 = vsel %vm76, %v536, %v514
    %v538 = vsel %vm78, %v537, %v518
    %v539 = vsel %vm80, %v538, %v522
    %v540 = vsel %vm82, %v539, %v526
    %v541 = vsel %vm84, %v540, %v530
    %v542 = vsel %vm86, %v541, %v534
    %v544 = vrot.slane %v152, 7
    %v547 = vrot.slane %v217, 6
    %v550 = vrot.slane %v282, 5
    %v553 = vrot.slane %v347, 4
    %v556 = vrot.slane %v412, 3
    %v559 = vrot.slane %v477, 2
    %v562 = vrot.slane %v542, 1
    %vm564 = vcmask 1040384
    %v565 = vsel %vm564, %v87, %v544
    %vm566 = vcmask 1041408
    %v567 = vsel %vm566, %v565, %v547
    %vm568 = vcmask 1042432
    %v569 = vsel %vm568, %v567, %v550
    %vm570 = vcmask 1043456
    %v571 = vsel %vm570, %v569, %v553
    %vm572 = vcmask 1044480
    %v573 = vsel %vm572, %v571, %v556
    %vm574 = vcmask 1045504
    %v575 = vsel %vm574, %v573, %v559
    %vm576 = vcmask 1046528
    %v577 = vsel %vm576, %v575, %v562
    %578 = vst [vmem:[#allocation4] sm:$0xff] %v577
    // Predicated region
    $region6: #{tpu_custom_call.1} parent=1 // pred_check
      _
    $region7: #{tpu_custom_call.1} parent=1 // pred_check_branch
      %580 = sbr.rel (0) target = $region9
    $region8: #{tpu_custom_call.1} parent=1 // pred_region
      %s582 = ssub.s32 128, 128
      %583 = vsyncadd [#allocation5], %s582
      %s585 = sshll.u32 [#allocation4], 4
      %s586 = int_to_ptr.vmem [resolvable:$true] %s585
      %588 = dma.vmem_to_hbm [thread:$0]  %s586, 128, %s2, [#allocation5]
    $region9: #{tpu_custom_call.1} parent=1 // pred_fallthru
      _
    // Predicated region
    $region10: #{tpu_custom_call.1} parent=1 // pred_check
      _
    $region11: #{tpu_custom_call.1} parent=1 // pred_check_branch
      %590 = sbr.rel (0) target = $region13
    $region12: #{tpu_custom_call.1} parent=1 // pred_region
      %591 = dma.done [#allocation5], 128
    $region13: #{tpu_custom_call.1} parent=1 // pred_fallthru
      _
    %592 = vsyncpa [#allocation5], 1

</llo_original>
